<compile_context>
chip_gen: v6e
topology: v6e:2x2x1
jax: 0.10.0
libtpu: 0.0.40
codegen_flags: <defaults>
</compile_context>

<pallas_src>
import functools

import jax
import jax.numpy as jnp
from jax.experimental import pallas as pl
from jax.experimental.pallas import tpu as pltpu

EPS = 1e-5
LANE = 128


def _round_up(x, m):
    return (x + m - 1) // m * m


# ---------------------------------------------------------------------------
# Kernels
# ---------------------------------------------------------------------------
def _conv_stats_kernel(p_ref, w_ref, b_ref, stat_ref, *, tm, m_valid):
    """Pass A: conv (bf16 matmul, f32 acc) + bias + ReLU, emit per-tile
    partial sum / sum-of-squares over the M axis (single-pass BN stats)."""
    y = jnp.dot(p_ref[...], w_ref[...], preferred_element_type=jnp.float32)
    y = jnp.maximum(y + b_ref[...], 0.0)                   # bias + ReLU
    if m_valid is not None:                                 # mask padded M rows
        row = jax.lax.broadcasted_iota(jnp.int32, y.shape, 0) + pl.program_id(0) * tm
        y = jnp.where(row < m_valid, y, 0.0)
    s = jnp.sum(y, axis=0, keepdims=True)                  # (1, Cpad)
    ss = jnp.sum(y * y, axis=0, keepdims=True)             # (1, Cpad)
    stat_ref[...] = jnp.concatenate([s, ss], axis=0).reshape(stat_ref.shape)


def _conv_norm_kernel(p_ref, w_ref, b_ref, scale_ref, shift_ref, o_ref):
    """Pass B: conv + bias + ReLU + pre-folded BatchNorm (y*scale + shift)."""
    y = jnp.dot(p_ref[...], w_ref[...], preferred_element_type=jnp.float32)
    y = jnp.maximum(y + b_ref[...], 0.0)
    o_ref[...] = (y * scale_ref[...] + shift_ref[...]).astype(o_ref.dtype)


# ---------------------------------------------------------------------------
# Host-side layout glue
# ---------------------------------------------------------------------------
def _im2col_reflect(x_nchw, k=3, stride=2, pad=1):
    """Reflect-pad + extract k x k / stride patches. Returns (M, k*k*Cin)."""
    x = jnp.transpose(x_nchw, (0, 2, 3, 1))                               # NHWC
    x = jnp.pad(x, ((0, 0), (pad, pad), (pad, pad), (0, 0)), mode="reflect")
    N, Hp, Wp, C = x.shape
    Ho = (Hp - k) // stride + 1
    Wo = (Wp - k) // stride + 1
    cols = []
    for kh in range(k):
        for kw in range(k):
            cols.append(
                x[:, kh:kh + stride * (Ho - 1) + 1:stride,
                     kw:kw + stride * (Wo - 1) + 1:stride, :])
    patches = jnp.stack(cols, axis=-2)                                    # (N,Ho,Wo,k*k,C)
    return patches.reshape(N * Ho * Wo, k * k * C), (N, Ho, Wo)


# ---------------------------------------------------------------------------
# Forward wrapper
# ---------------------------------------------------------------------------
@functools.partial(jax.jit, static_argnames=("tm",))
def downsample_forward(x_nchw, w_oihw, bias, gamma, beta, *, tm=512):
    Cout, Cin, k, _ = w_oihw.shape

    patches, (N, Ho, Wo) = _im2col_reflect(x_nchw, k=k, stride=2, pad=1)
    M, K = patches.shape

    # Lane-dense padding of both matmul axes.
    K_pad = _round_up(K, LANE)
    C_pad = _round_up(Cout, LANE)

    # Tile size over M; shrink until the double-buffered block footprint is
    # comfortably below a v7x-safe VMEM budget.
    tm = max(8, min(tm, _round_up(M, 8)))

    def _vmem_bytes(t):
        return (2 * t * K_pad * 2            # patch tile, bf16, double-buffered
                + 2 * K_pad * C_pad * 2      # weights, bf16
                + 8 * C_pad * 4              # bias / scale / shift rows
                + 2 * t * C_pad * 4          # output tile, f32, double-buffered
                + t * C_pad * 4)             # in-kernel f32 temporaries

    while _vmem_bytes(tm) > (40 << 20) and tm > 8:
        tm = max(8, tm // 2)

    M_pad = _round_up(M, tm)
    n_tiles = M_pad // tm
    vmem_limit = int(min(max(_vmem_bytes(tm) * 3 // 2 + (2 << 20), 16 << 20), 48 << 20))

    # bf16 operands (f32 accumulation inside the kernel), zero-padded.
    patches_p = jnp.pad(patches.astype(jnp.bfloat16),
                        ((0, M_pad - M), (0, K_pad - K)))
    # weight (O,I,kh,kw) -> (kh,kw,I,O) -> (K,Cout), matching patch column order.
    w_mat = jnp.transpose(w_oihw, (2, 3, 1, 0)).reshape(K, Cout)
    w_p = jnp.pad(w_mat.astype(jnp.bfloat16), ((0, K_pad - K), (0, C_pad - Cout)))
    b_row = jnp.pad(bias.astype(jnp.float32), (0, C_pad - Cout)).reshape(1, C_pad)

    grid = (n_tiles,)
    compiler_params = pltpu.CompilerParams(
        dimension_semantics=("parallel",),
        vmem_limit_bytes=vmem_limit,
    )
    patch_spec = pl.BlockSpec((tm, K_pad), lambda i: (i, 0))
    w_spec = pl.BlockSpec((K_pad, C_pad), lambda i: (0, 0))
    row_spec = pl.BlockSpec((1, C_pad), lambda i: (0, 0))

    # ---- Pass A: per-tile partial BN statistics -----------------------------
    m_valid = None if M_pad == M else M
    stats = pl.pallas_call(
        functools.partial(_conv_stats_kernel, tm=tm, m_valid=m_valid),
        out_shape=jax.ShapeDtypeStruct((n_tiles, 2, C_pad), jnp.float32),
        grid=grid,
        in_specs=[patch_spec, w_spec, row_spec],
        out_specs=pl.BlockSpec((1, 2, C_pad), lambda i: (i, 0, 0)),
        compiler_params=compiler_params,
        cost_estimate=pl.CostEstimate(
            flops=2 * M_pad * K_pad * C_pad,
            transcendentals=0,
            bytes_accessed=M_pad * K_pad * 2 + K_pad * C_pad * 2
            + n_tiles * 2 * C_pad * 4),
    )(patches_p, w_p, b_row)

    # ---- Tiny reduce + fold BN into one scale/shift row pair ----------------
    total = jnp.sum(stats, axis=0)                        # (2, C_pad)
    mean = total[0] / M
    var = jnp.maximum(total[1] / M - mean * mean, 0.0)    # biased batch variance
    inv = jax.lax.rsqrt(var + EPS)
    gamma_p = jnp.pad(gamma.astype(jnp.float32), (0, C_pad - Cout))
    beta_p = jnp.pad(beta.astype(jnp.float32), (0, C_pad - Cout))
    scale = (gamma_p * inv).reshape(1, C_pad)
    shift = (beta_p - mean * gamma_p * inv).reshape(1, C_pad)

    # ---- Pass B: conv + bias + ReLU + folded BN ------------------------------
    out_flat = pl.pallas_call(
        _conv_norm_kernel,
        out_shape=jax.ShapeDtypeStruct((M_pad, C_pad), jnp.float32),
        grid=grid,
        in_specs=[patch_spec, w_spec, row_spec, row_spec, row_spec],
        out_specs=pl.BlockSpec((tm, C_pad), lambda i: (i, 0)),
        compiler_params=compiler_params,
        cost_estimate=pl.CostEstimate(
            flops=2 * M_pad * K_pad * C_pad,
            transcendentals=0,
            bytes_accessed=M_pad * K_pad * 2 + K_pad * C_pad * 2
            + M_pad * C_pad * 4),
    )(patches_p, w_p, b_row, scale, shift)

    # (M_pad, C_pad) -> (N, Ho, Wo, Cout) -> NCHW to match the PyTorch module.
    out_nhwc = out_flat[:M, :Cout].reshape(N, Ho, Wo, Cout)
    return jnp.transpose(out_nhwc, (0, 3, 1, 2))


# ---------------------------------------------------------------------------
# Pure-JAX reference (training-mode BN, p=0 dropout == identity)
# ---------------------------------------------------------------------------
def _reference_forward(x, w, b, gamma, beta, cast_matmul_inputs_to_bf16=False):
    xp = jnp.pad(x, ((0, 0), (0, 0), (1, 1), (1, 1)), mode="reflect")
    if cast_matmul_inputs_to_bf16:
        xp = xp.astype(jnp.bfloat16).astype(jnp.float32)
        w = w.astype(jnp.bfloat16).astype(jnp.float32)
    conv = jax.lax.conv_general_dilated(
        xp, w, window_strides=(2, 2), padding="VALID",
        dimension_numbers=("NCHW", "OIHW", "NCHW"))
    y = jnp.maximum(conv + b.reshape(1, -1, 1, 1), 0.0)
    mean = y.mean(axis=(0, 2, 3), keepdims=True)
    var = ((y - mean) ** 2).mean(axis=(0, 2, 3), keepdims=True)
    return ((y - mean) / jnp.sqrt(var + EPS) * gamma.reshape(1, -1, 1, 1)
            + beta.reshape(1, -1, 1, 1))


if __name__ == "__main__":
    key = jax.random.PRNGKey(0)
    k_x, k_w, k_b = jax.random.split(key, 3)

    N, Cin, H, W = 2, 4, 16, 16
    Cout = Cin * 2

    x = jax.random.normal(k_x, (N, Cin, H, W), dtype=jnp.float32)

    # Deterministic synthetic parameters (shapes from nn.Conv2d / nn.BatchNorm2d).
    w = 0.1 * jax.random.normal(k_w, (Cout, Cin, 3, 3), dtype=jnp.float32)  # conv weight
    b = 0.01 * jax.random.normal(k_b, (Cout,), dtype=jnp.float32)           # conv bias
    gamma = 1.0 + 0.1 * jnp.arange(Cout, dtype=jnp.float32)                 # BN weight
    beta = 0.05 * jnp.arange(Cout, dtype=jnp.float32)                       # BN bias

    # tm=32 -> M=128 rows split into a 4-step pipelined grid for the toy size.
    out = downsample_forward(x, w, b, gamma, beta, tm=32)
    out = jax.block_until_ready(out)

    assert out.shape == (N, Cout, H // 2, W // 2), out.shape

    # Tight check against a reference that rounds the matmul operands to bf16
    # exactly as the kernel does (validates kernel logic).
    ref_bf = _reference_forward(x, w, b, gamma, beta, cast_matmul_inputs_to_bf16=True)
    assert jnp.allclose(out, ref_bf, atol=2e-3, rtol=2e-3), \
        float(jnp.max(jnp.abs(out - ref_bf)))

    # Loose check against the exact f32 PyTorch-equivalent module (bf16 operand
    # quantization is the only difference).
    ref = _reference_forward(x, w, b, gamma, beta)
    assert jnp.allclose(out, ref, atol=6e-2, rtol=6e-2), \
        float(jnp.max(jnp.abs(out - ref)))

    print("KERNEL_OK")
</pallas_src>

<mosaic_0001>
module attributes {stable_mosaic.version = 11 : i64} {
  func.func @_conv_norm_kernel(%arg0: i32, %arg1: memref<32x128xbf16, #tpu.memory_space<vmem>>, %arg2: memref<128x128xbf16, #tpu.memory_space<vmem>>, %arg3: memref<1x128xf32, #tpu.memory_space<vmem>>, %arg4: memref<1x128xf32, #tpu.memory_space<vmem>>, %arg5: memref<1x128xf32, #tpu.memory_space<vmem>>, %arg6: memref<32x128xf32, #tpu.memory_space<vmem>>) attributes {dimension_semantics = [#tpu.dimension_semantics<parallel>], iteration_bounds = array<i64: 4>, scalar_prefetch = 0 : i64, scratch_operands = 0 : i64, tpu.core_type = #tpu.core_type<tc>, window_params = [{transform_indices = @transform_0, window_bounds = array<i64: 32, 128>}, {pipeline_mode = #tpu.pipeline_mode<synchronous>, transform_indices = @transform_1, window_bounds = array<i64: 128, 128>}, {pipeline_mode = #tpu.pipeline_mode<synchronous>, transform_indices = @transform_2, window_bounds = array<i64: 1, 128>}, {pipeline_mode = #tpu.pipeline_mode<synchronous>, transform_indices = @transform_3, window_bounds = array<i64: 1, 128>}, {pipeline_mode = #tpu.pipeline_mode<synchronous>, transform_indices = @transform_4, window_bounds = array<i64: 1, 128>}, {transform_indices = @transform_5, window_bounds = array<i64: 32, 128>}]} {
    %c0 = arith.constant 0 : index
    %c0_0 = arith.constant 0 : index
    %0 = vector.load %arg1[%c0, %c0_0] : memref<32x128xbf16, #tpu.memory_space<vmem>>, vector<32x128xbf16>
    %c0_1 = arith.constant 0 : index
    %c0_2 = arith.constant 0 : index
    %1 = vector.load %arg2[%c0_1, %c0_2] : memref<128x128xbf16, #tpu.memory_space<vmem>>, vector<128x128xbf16>
    %cst = arith.constant dense<0.000000e+00> : vector<32x128xf32>
    %2 = tpu.matmul %0, %1, %cst {dimension_numbers = #tpu.dot_dimension_numbers<[1], [0], [0], [1], [0, 0, 1, 1], [], []>} : vector<32x128xbf16>, vector<128x128xbf16>, vector<32x128xf32> -> vector<32x128xf32>
    %c0_3 = arith.constant 0 : index
    %c0_4 = arith.constant 0 : index
    %3 = vector.load %arg3[%c0_3, %c0_4] : memref<1x128xf32, #tpu.memory_space<vmem>>, vector<1x128xf32>
    %4 = vector.broadcast %3 : vector<1x128xf32> to vector<32x128xf32>
    %5 = arith.addf %2, %4 : vector<32x128xf32>
    %cst_5 = arith.constant 0.000000e+00 : f32
    %6 = vector.broadcast %cst_5 : f32 to vector<32x128xf32>
    %7 = arith.maximumf %5, %6 : vector<32x128xf32>
    %c0_6 = arith.constant 0 : index
    %c0_7 = arith.constant 0 : index
    %8 = vector.load %arg4[%c0_6, %c0_7] : memref<1x128xf32, #tpu.memory_space<vmem>>, vector<1x128xf32>
    %9 = vector.broadcast %8 : vector<1x128xf32> to vector<32x128xf32>
    %10 = arith.mulf %7, %9 : vector<32x128xf32>
    %c0_8 = arith.constant 0 : index
    %c0_9 = arith.constant 0 : index
    %11 = vector.load %arg5[%c0_8, %c0_9] : memref<1x128xf32, #tpu.memory_space<vmem>>, vector<1x128xf32>
    %12 = vector.broadcast %11 : vector<1x128xf32> to vector<32x128xf32>
    %13 = arith.addf %10, %12 : vector<32x128xf32>
    %c0_10 = arith.constant 0 : index
    %c0_11 = arith.constant 0 : index
    %14 = vector.load %arg6[%c0_10, %c0_11] : memref<32x128xf32, #tpu.memory_space<vmem>>, vector<32x128xf32>
    tpu.vector_store %arg6[%c0_10, %c0_11], %13 {strides = array<i32>} : memref<32x128xf32, #tpu.memory_space<vmem>>, vector<32x128xf32>,
    return
  }
  func.func @transform_0(%arg0: i32) -> (i32, i32) {
    %c0_i32 = arith.constant 0 : i32
    %c0_i32_0 = arith.constant 0 : i32
    return %arg0, %c0_i32 : i32, i32
  }
  func.func @transform_1(%arg0: i32) -> (i32, i32) {
    %c0_i32 = arith.constant 0 : i32
    %c0_i32_0 = arith.constant 0 : i32
    %c0_i32_1 = arith.constant 0 : i32
    return %c0_i32, %c0_i32_0 : i32, i32
  }
  func.func @transform_2(%arg0: i32) -> (i32, i32) {
    %c0_i32 = arith.constant 0 : i32
    %c0_i32_0 = arith.constant 0 : i32
    %c0_i32_1 = arith.constant 0 : i32
    return %c0_i32, %c0_i32_0 : i32, i32
  }
  func.func @transform_3(%arg0: i32) -> (i32, i32) {
    %c0_i32 = arith.constant 0 : i32
    %c0_i32_0 = arith.constant 0 : i32
    %c0_i32_1 = arith.constant 0 : i32
    return %c0_i32, %c0_i32_0 : i32, i32
  }
  func.func @transform_4(%arg0: i32) -> (i32, i32) {
    %c0_i32 = arith.constant 0 : i32
    %c0_i32_0 = arith.constant 0 : i32
    %c0_i32_1 = arith.constant 0 : i32
    return %c0_i32, %c0_i32_0 : i32, i32
  }
  func.func @transform_5(%arg0: i32) -> (i32, i32) {
    %c0_i32 = arith.constant 0 : i32
    %c0_i32_0 = arith.constant 0 : i32
    return %arg0, %c0_i32 : i32, i32
  }
}

module attributes {stable_mosaic.version = 11 : i64} {
  func.func @_conv_stats_kernel(%arg0: i32, %arg1: memref<32x128xbf16, #tpu.memory_space<vmem>>, %arg2: memref<128x128xbf16, #tpu.memory_space<vmem>>, %arg3: memref<1x128xf32, #tpu.memory_space<vmem>>, %arg4: memref<1x2x128xf32, #tpu.memory_space<vmem>>) attributes {dimension_semantics = [#tpu.dimension_semantics<parallel>], iteration_bounds = array<i64: 4>, scalar_prefetch = 0 : i64, scratch_operands = 0 : i64, tpu.core_type = #tpu.core_type<tc>, window_params = [{transform_indices = @transform_0, window_bounds = array<i64: 32, 128>}, {pipeline_mode = #tpu.pipeline_mode<synchronous>, transform_indices = @transform_1, window_bounds = array<i64: 128, 128>}, {pipeline_mode = #tpu.pipeline_mode<synchronous>, transform_indices = @transform_2, window_bounds = array<i64: 1, 128>}, {transform_indices = @transform_3, window_bounds = array<i64: 1, 2, 128>}]} {
    %c0 = arith.constant 0 : index
    %c0_0 = arith.constant 0 : index
    %0 = vector.load %arg1[%c0, %c0_0] : memref<32x128xbf16, #tpu.memory_space<vmem>>, vector<32x128xbf16>
    %c0_1 = arith.constant 0 : index
    %c0_2 = arith.constant 0 : index
    %1 = vector.load %arg2[%c0_1, %c0_2] : memref<128x128xbf16, #tpu.memory_space<vmem>>, vector<128x128xbf16>
    %cst = arith.constant dense<0.000000e+00> : vector<32x128xf32>
    %2 = tpu.matmul %0, %1, %cst {dimension_numbers = #tpu.dot_dimension_numbers<[1], [0], [0], [1], [0, 0, 1, 1], [], []>} : vector<32x128xbf16>, vector<128x128xbf16>, vector<32x128xf32> -> vector<32x128xf32>
    %c0_3 = arith.constant 0 : index
    %c0_4 = arith.constant 0 : index
    %3 = vector.load %arg3[%c0_3, %c0_4] : memref<1x128xf32, #tpu.memory_space<vmem>>, vector<1x128xf32>
    %4 = vector.broadcast %3 : vector<1x128xf32> to vector<32x128xf32>
    %5 = arith.addf %2, %4 : vector<32x128xf32>
    %cst_5 = arith.constant 0.000000e+00 : f32
    %6 = vector.broadcast %cst_5 : f32 to vector<32x128xf32>
    %7 = arith.maximumf %5, %6 : vector<32x128xf32>
    %cst_6 = arith.constant dense<0.000000e+00> : vector<128xf32>
    %8 = vector.multi_reduction <add>, %7, %cst_6 [0] : vector<32x128xf32> to vector<128xf32>
    %9 = vector.shape_cast %8 : vector<128xf32> to vector<1x128xf32>
    %10 = arith.mulf %7, %7 : vector<32x128xf32>
    %cst_7 = arith.constant dense<0.000000e+00> : vector<128xf32>
    %11 = vector.multi_reduction <add>, %10, %cst_7 [0] : vector<32x128xf32> to vector<128xf32>
    %12 = vector.shape_cast %11 : vector<128xf32> to vector<1x128xf32>
    %13 = tpu.concatenate %9, %12 in 0 : vector<1x128xf32>, vector<1x128xf32> -> vector<2x128xf32>
    %14 = vector.shape_cast %13 : vector<2x128xf32> to vector<1x2x128xf32>
    %c0_8 = arith.constant 0 : index
    %c0_9 = arith.constant 0 : index
    %c0_10 = arith.constant 0 : index
    %15 = vector.load %arg4[%c0_8, %c0_9, %c0_10] : memref<1x2x128xf32, #tpu.memory_space<vmem>>, vector<1x2x128xf32>
    tpu.vector_store %arg4[%c0_8, %c0_9, %c0_10], %14 {strides = array<i32>} : memref<1x2x128xf32, #tpu.memory_space<vmem>>, vector<1x2x128xf32>,
    return
  }
  func.func @transform_0(%arg0: i32) -> (i32, i32) {
    %c0_i32 = arith.constant 0 : i32
    %c0_i32_0 = arith.constant 0 : i32
    return %arg0, %c0_i32 : i32, i32
  }
  func.func @transform_1(%arg0: i32) -> (i32, i32) {
    %c0_i32 = arith.constant 0 : i32
    %c0_i32_0 = arith.constant 0 : i32
    %c0_i32_1 = arith.constant 0 : i32
    return %c0_i32, %c0_i32_0 : i32, i32
  }
  func.func @transform_2(%arg0: i32) -> (i32, i32) {
    %c0_i32 = arith.constant 0 : i32
    %c0_i32_0 = arith.constant 0 : i32
    %c0_i32_1 = arith.constant 0 : i32
    return %c0_i32, %c0_i32_0 : i32, i32
  }
  func.func @transform_3(%arg0: i32) -> (i32, i32, i32) {
    %c0_i32 = arith.constant 0 : i32
    %c0_i32_0 = arith.constant 0 : i32
    %c0_i32_1 = arith.constant 0 : i32
    return %arg0, %c0_i32, %c0_i32_0 : i32, i32, i32
  }
}

</mosaic_0001>

<llo_original>
// kernel: downsample_forward.3
$region0: #{downsample_forward.3}
  #allocation0 [shape = 'u32[]', space=smem, size = 0x4, offset = 0x4, fixed_abs, tag = 'smem constant byte address 0x4 - core index']
  #allocation1 [shape = 'u32[144,128]{1,0:T(1,128)}', space=vmem, size = 0x12000, scoped, tag = 'internal scratch']
  %s0 = inlined_call_operand.vmem [shape: bf16[128,128], index: 0, kind: input, shape index: {}]
  %s1 = inlined_call_operand.vmem [shape: bf16[128,128], index: 1, kind: input, shape index: {}]
  %s2 = inlined_call_operand.vmem [shape: f32[1,128], index: 2, kind: input, shape index: {}]
  %s3 = inlined_call_operand.vmem [shape: f32[1,128], index: 3, kind: input, shape index: {}]
  %s4 = inlined_call_operand.vmem [shape: f32[1,128], index: 4, kind: input, shape index: {}]
  %s5 = inlined_call_operand.vmem [shape: f32[128,128], index: 5, kind: output, shape index: {}]
  %s6 = sld [smem:[#allocation0]]
  $region53: #{downsample_forward.3} parent=0
    _
  %s8 = ssub.s32 1, %s6
  %s9 = scalar_select 0, %s8, %s6
  loop: start=0, step=1, limit=6
  $region2: #{downsample_forward.3} parent=0 // loop_pre_header
    _
  $region3: #{downsample_forward.3} parent=0 // loop_header
    %s11 = sphi 0, %s15
    %p12 = scmp.ge.s32.totalorder %s11, 6
    %s21 = sphi 0, %s23
    %s24 = sphi 0, %s21
    %s25 = sphi 0, %s24
    %s41 = sphi 0, %s25
    %s45 = sphi 0, %s45
    %s47 = sphi 0, %s45
    %s48 = sphi 0, %s47
    %s62 = sphi 0, %s48
    %s66 = sphi 0, %s66
    %s68 = sphi 0, %s66
    %s69 = sphi 0, %s68
    %s83 = sphi 0, %s69
    %s87 = sphi 0, %s87
    %s89 = sphi 0, %s87
    %s90 = sphi 0, %s89
    %s104 = sphi 0, %s90
    %s108 = sphi 0, %s108
    %s110 = sphi 0, %s108
    %s111 = sphi 0, %s110
    %s125 = sphi 0, %s111
    %s131 = sphi 0, %s133
    %s134 = sphi 0, %s131
    %s135 = sphi 0, %s134
    %s151 = sphi 0, %s135
  $region4: #{downsample_forward.3} parent=0 // loop_header_branch
    %14 = sbr.rel (%p12) target = $region8
  $region5: #{downsample_forward.3} parent=0 // loop_body
    %s16 = ssub.s32 %s11, 1
    %s17 = ssub.s32 %s11, 2
    %s18 = sadd.s32 %s11, 1
    %s19 = ssub.s32 %s11, %s18
    %p20 = scmp.eq.s32.totalorder %s19, 0
    %s22 = sadd.s32 %s21, 1
    %s23 = scalar_select %p20, %s21, %s22
    %p26 = pneg %p20
    %p27 = scmp.eq.s32.totalorder %s11, 3
    %p28 = por %p26, %p27
    %p29 = scmp.ne.s32.totalorder %s21, %s24
    %p30 = scmp.eq.s32.totalorder %s11, 0
    %p31 = por %p29, %p30
    %p32 = scmp.ne.s32.totalorder %s21, %s24
    %p33 = scmp.eq.s32.totalorder %s16, 3
    %p34 = por %p32, %p33
    %p35 = scmp.ne.s32.totalorder %s24, %s25
    %p36 = scmp.eq.s32.totalorder %s16, 0
    %p37 = por %p35, %p36
    %p38 = scmp.ne.s32.totalorder %s24, %s25
    %p39 = scmp.eq.s32.totalorder %s17, 3
    %p40 = por %p38, %p39
    %p42 = scmp.ne.s32.totalorder %s25, %s41
    %p43 = scmp.eq.s32.totalorder %s17, 0
    %p44 = por %p42, %p43
    %s46 = sadd.s32 %s45, 1
    %p49 = scmp.eq.s32.totalorder %s11, 3
    %p50 = scmp.ne.s32.totalorder %s45, %s47
    %p51 = scmp.eq.s32.totalorder %s11, 0
    %p52 = por %p50, %p51
    %p53 = scmp.ne.s32.totalorder %s45, %s47
    %p54 = scmp.eq.s32.totalorder %s16, 3
    %p55 = por %p53, %p54
    %p56 = scmp.ne.s32.totalorder %s47, %s48
    %p57 = scmp.eq.s32.totalorder %s16, 0
    %p58 = por %p56, %p57
    %p59 = scmp.ne.s32.totalorder %s47, %s48
    %p60 = scmp.eq.s32.totalorder %s17, 3
    %p61 = por %p59, %p60
    %p63 = scmp.ne.s32.totalorder %s48, %s62
    %p64 = scmp.eq.s32.totalorder %s17, 0
    %p65 = por %p63, %p64
    %s67 = sadd.s32 %s66, 1
    %p70 = scmp.eq.s32.totalorder %s11, 3
    %p71 = scmp.ne.s32.totalorder %s66, %s68
    %p72 = scmp.eq.s32.totalorder %s11, 0
    %p73 = por %p71, %p72
    %p74 = scmp.ne.s32.totalorder %s66, %s68
    %p75 = scmp.eq.s32.totalorder %s16, 3
    %p76 = por %p74, %p75
    %p77 = scmp.ne.s32.totalorder %s68, %s69
    %p78 = scmp.eq.s32.totalorder %s16, 0
    %p79 = por %p77, %p78
    %p80 = scmp.ne.s32.totalorder %s68, %s69
    %p81 = scmp.eq.s32.totalorder %s17, 3
    %p82 = por %p80, %p81
    %p84 = scmp.ne.s32.totalorder %s69, %s83
    %p85 = scmp.eq.s32.totalorder %s17, 0
    %p86 = por %p84, %p85
    %s88 = sadd.s32 %s87, 1
    %p91 = scmp.eq.s32.totalorder %s11, 3
    %p92 = scmp.ne.s32.totalorder %s87, %s89
    %p93 = scmp.eq.s32.totalorder %s11, 0
    %p94 = por %p92, %p93
    %p95 = scmp.ne.s32.totalorder %s87, %s89
    %p96 = scmp.eq.s32.totalorder %s16, 3
    %p97 = por %p95, %p96
    %p98 = scmp.ne.s32.totalorder %s89, %s90
    %p99 = scmp.eq.s32.totalorder %s16, 0
    %p100 = por %p98, %p99
    %p101 = scmp.ne.s32.totalorder %s89, %s90
    %p102 = scmp.eq.s32.totalorder %s17, 3
    %p103 = por %p101, %p102
    %p105 = scmp.ne.s32.totalorder %s90, %s104
    %p106 = scmp.eq.s32.totalorder %s17, 0
    %p107 = por %p105, %p106
    %s109 = sadd.s32 %s108, 1
    %p112 = scmp.eq.s32.totalorder %s11, 3
    %p113 = scmp.ne.s32.totalorder %s108, %s110
    %p114 = scmp.eq.s32.totalorder %s11, 0
    %p115 = por %p113, %p114
    %p116 = scmp.ne.s32.totalorder %s108, %s110
    %p117 = scmp.eq.s32.totalorder %s16, 3
    %p118 = por %p116, %p117
    %p119 = scmp.ne.s32.totalorder %s110, %s111
    %p120 = scmp.eq.s32.totalorder %s16, 0
    %p121 = por %p119, %p120
    %p122 = scmp.ne.s32.totalorder %s110, %s111
    %p123 = scmp.eq.s32.totalorder %s17, 3
    %p124 = por %p122, %p123
    %p126 = scmp.ne.s32.totalorder %s111, %s125
    %p127 = scmp.eq.s32.totalorder %s17, 0
    %p128 = por %p126, %p127
    %s129 = ssub.s32 %s11, %s18
    %p130 = scmp.eq.s32.totalorder %s129, 0
    %s132 = sadd.s32 %s131, 1
    %s133 = scalar_select %p130, %s131, %s132
    %p136 = pneg %p130
    %p137 = scmp.eq.s32.totalorder %s11, 3
    %p138 = por %p136, %p137
    %p139 = scmp.ne.s32.totalorder %s131, %s134
    %p140 = scmp.eq.s32.totalorder %s11, 0
    %p141 = por %p139, %p140
    %p142 = scmp.ne.s32.totalorder %s131, %s134
    %p143 = scmp.eq.s32.totalorder %s16, 3
    %p144 = por %p142, %p143
    %p145 = scmp.ne.s32.totalorder %s134, %s135
    %p146 = scmp.eq.s32.totalorder %s16, 0
    %p147 = por %p145, %p146
    %p148 = scmp.ne.s32.totalorder %s134, %s135
    %p149 = scmp.eq.s32.totalorder %s17, 3
    %p150 = por %p148, %p149
    %p152 = scmp.ne.s32.totalorder %s135, %s151
    %p153 = scmp.eq.s32.totalorder %s17, 0
    %p154 = por %p152, %p153
    %p155 = scmp.le.s32.totalorder 1, %s11
    %p156 = scmp.lt.s32.totalorder %s11, 5
    %p157 = pnand %p155, %p156
    %p158 = pneg %p157
    // Predicated region
    $region9: #{downsample_forward.3} parent=5 // pred_check
      _
    $region10: #{downsample_forward.3} parent=5 // pred_check_branch
      %160 = sbr.rel (%p157) target = $region12
    $region11: #{downsample_forward.3} parent=5 // pred_region
      %s161 = ssub.s32 %s11, 1
      // Predicated region
      $region13: #{downsample_forward.3} parent=11 // pred_check
        %p162 = pneg %p58
      $region14: #{downsample_forward.3} parent=11 // pred_check_branch
        %164 = sbr.rel (%p162) target = $region16
      $region15: #{downsample_forward.3} parent=11 // pred_region
        _
      $region16: #{downsample_forward.3} parent=11 // pred_fallthru
        _
      // Predicated region
      $region17: #{downsample_forward.3} parent=11 // pred_check
        %p165 = pneg %p79
      $region18: #{downsample_forward.3} parent=11 // pred_check_branch
        %167 = sbr.rel (%p165) target = $region20
      $region19: #{downsample_forward.3} parent=11 // pred_region
        _
      $region20: #{downsample_forward.3} parent=11 // pred_fallthru
        _
      // Predicated region
      $region21: #{downsample_forward.3} parent=11 // pred_check
        %p168 = pneg %p100
      $region22: #{downsample_forward.3} parent=11 // pred_check_branch
        %170 = sbr.rel (%p168) target = $region24
      $region23: #{downsample_forward.3} parent=11 // pred_region
        _
      $region24: #{downsample_forward.3} parent=11 // pred_fallthru
        _
      // Predicated region
      $region25: #{downsample_forward.3} parent=11 // pred_check
        %p171 = pneg %p121
      $region26: #{downsample_forward.3} parent=11 // pred_check_branch
        %173 = sbr.rel (%p171) target = $region28
      $region27: #{downsample_forward.3} parent=11 // pred_region
        _
      $region28: #{downsample_forward.3} parent=11 // pred_fallthru
        _
    $region12: #{downsample_forward.3} parent=5 // pred_fallthru
      _
    %p174 = scmp.lt.s32.totalorder %s11, 4
    // Predicated region
    $region29: #{downsample_forward.3} parent=5 // pred_check
      %p175 = pneg %p174
    $region30: #{downsample_forward.3} parent=5 // pred_check_branch
      %177 = sbr.rel (%p175) target = $region32
    $region31: #{downsample_forward.3} parent=5 // pred_region
      // Predicated region
      $region33: #{downsample_forward.3} parent=31 // pred_check
        %p178 = pneg %p31
      $region34: #{downsample_forward.3} parent=31 // pred_check_branch
        %180 = sbr.rel (%p178) target = $region36
      $region35: #{downsample_forward.3} parent=31 // pred_region
        %s181 = smul.u32 4, %s11
        %p182 = scmp.lt.s32.totalorder %s181, 15
        %s183 = scalar_select %p182, %s181, 15
        %s184 = smul.addr %s183, 4
        %s185 = scalar_lea.vmem %s0, %s184
        %s186 = smul.u32 4, %s11
      $region36: #{downsample_forward.3} parent=31 // pred_fallthru
        _
    $region32: #{downsample_forward.3} parent=5 // pred_fallthru
      _
    %p187 = scmp.le.s32.totalorder 1, %s11
    %p188 = scmp.lt.s32.totalorder %s11, 5
    %p189 = pnand %p187, %p188
    %p190 = pneg %p189
    // Predicated region
    $region37: #{downsample_forward.3} parent=5 // pred_check
      _
    $region38: #{downsample_forward.3} parent=5 // pred_check_branch
      %192 = sbr.rel (%p189) target = $region40
    $region39: #{downsample_forward.3} parent=5 // pred_region
      %s193 = ssub.s32 %s11, 1
      %s194 = smul.u32 4, %s16
      %p195 = scmp.lt.s32.totalorder %s194, 15
      %s196 = scalar_select %p195, %s194, 15
      %s197 = smul.addr %s196, 4
      %s198 = scalar_lea.vmem %s0, %s197
      %p199 = pneg %p37
      %p200 = pneg %p34
      %p201 = pneg %p58
      %p202 = pneg %p55
      %p203 = pneg %p79
      %p204 = pneg %p76
      %p205 = pneg %p100
      %p206 = pneg %p97
      %p207 = pneg %p121
      %p208 = pneg %p118
      %p209 = pneg %p147
      %p210 = pneg %p144
      %s211 = smul.u32 4, %s16
      %p212 = scmp.lt.s32.totalorder %s211, 15
      %s213 = scalar_select %p212, %s211, 15
      %s214 = smul.addr %s213, 8
      %s215 = scalar_lea.vmem %s5, %s214
      %s216 = smul.u32 4, %s16
      %p217 = scmp.lt.s32.totalorder %s216, 15
      %s218 = scalar_select %p217, %s216, 15
      %s219 = smul.addr %s218, 4
      %s220 = scalar_lea.vmem %s0, %s219
      %s221 = smul.u32 4, %s16
      %s222 = smul.u32 4, %s16
      %p223 = scmp.lt.s32.totalorder %s222, 15
      %s224 = scalar_select %p223, %s222, 15
      %s225 = smul.addr %s224, 8
      %s226 = scalar_lea.vmem %s5, %s225
      %s227 = smul.u32 4, %s16
      %v229 = vld [vmem:[%s220] sm:$0xf]
      %v230 = vld [vmem:[%s220 + $0x4] sm:$0xf]
      %v231 = vld [vmem:[%s220 + $0x8] sm:$0xf]
      %v232 = vld [vmem:[%s220 + $0xc] sm:$0xf]
      %v233 = vld [vmem:[%s1] sm:$0xf]
      %v234 = vld [vmem:[%s1 + $0x4] sm:$0xf]
      %v235 = vld [vmem:[%s1 + $0x8] sm:$0xf]
      %v236 = vld [vmem:[%s1 + $0xc] sm:$0xf]
      %v237 = vld [vmem:[%s1 + $0x10] sm:$0xf]
      %v238 = vld [vmem:[%s1 + $0x14] sm:$0xf]
      %v239 = vld [vmem:[%s1 + $0x18] sm:$0xf]
      %v240 = vld [vmem:[%s1 + $0x1c] sm:$0xf]
      %v241 = vld [vmem:[%s1 + $0x20] sm:$0xf]
      %v242 = vld [vmem:[%s1 + $0x24] sm:$0xf]
      %v243 = vld [vmem:[%s1 + $0x28] sm:$0xf]
      %v244 = vld [vmem:[%s1 + $0x2c] sm:$0xf]
      %v245 = vld [vmem:[%s1 + $0x30] sm:$0xf]
      %v246 = vld [vmem:[%s1 + $0x34] sm:$0xf]
      %v247 = vld [vmem:[%s1 + $0x38] sm:$0xf]
      %v248 = vld [vmem:[%s1 + $0x3c] sm:$0xf]
      %v249 = vld [vmem:[%s2] sm:$0x1]
      %v251 = vlaneseq
      %v252 = vshrl.u32 %v251, 7
      %v253 = vsub.s32 0, %v252
      %v254 = vrot.slane %v249, %v253
      %v260 = vunpack.c.l.b16 %v229
      %v261 = vunpack.c.l.b16 %v230
      %v262 = vunpack.c.l.b16 %v231
      %v263 = vunpack.c.l.b16 %v232
      %v264 = vpack.c.b16 %v261, %v260
      %v265 = vpack.c.b16 %v263, %v262
      %v284 = vunpack.c.l.b16 %v233
      %v285 = vunpack.c.l.b16 %v234
      %v286 = vunpack.c.l.b16 %v235
      %v287 = vunpack.c.l.b16 %v236
      %v288 = vunpack.c.l.b16 %v237
      %v289 = vunpack.c.l.b16 %v238
      %v290 = vunpack.c.l.b16 %v239
      %v291 = vunpack.c.l.b16 %v240
      %v292 = vunpack.c.l.b16 %v241
      %v293 = vunpack.c.l.b16 %v242
      %v294 = vunpack.c.l.b16 %v243
      %v295 = vunpack.c.l.b16 %v244
      %v296 = vunpack.c.l.b16 %v245
      %v297 = vunpack.c.l.b16 %v246
      %v298 = vunpack.c.l.b16 %v247
      %v299 = vunpack.c.l.b16 %v248
      %v300 = vpack.c.b16 %v285, %v284
      %v301 = vpack.c.b16 %v287, %v286
      %v302 = vpack.c.b16 %v289, %v288
      %v303 = vpack.c.b16 %v291, %v290
      %v304 = vpack.c.b16 %v293, %v292
      %v305 = vpack.c.b16 %v295, %v294
      %v306 = vpack.c.b16 %v297, %v296
      %v307 = vpack.c.b16 %v299, %v298
      %316 = vmatprep.subr.bf16.mxu0 0
      %317 = vmatpush1.bf16.msra.mxu0 %v307
      %318 = vmatprep.subr.bf16.mxu0 0
      %319 = vmatpush1.bf16.msra.mxu0 %v306
      %320 = vmatprep.subr.bf16.mxu0 0
      %321 = vmatpush1.bf16.msra.mxu0 %v305
      %322 = vmatprep.subr.bf16.mxu0 0
      %323 = vmatpush1.bf16.msra.mxu0 %v304
      %324 = vmatprep.subr.bf16.mxu0 0
      %325 = vmatpush1.bf16.msra.mxu0 %v303
      %326 = vmatprep.subr.bf16.mxu0 0
      %327 = vmatpush1.bf16.msra.mxu0 %v302
      %328 = vmatprep.subr.bf16.mxu0 0
      %329 = vmatpush1.bf16.msra.mxu0 %v301
      %330 = vmatprep.subr.bf16.mxu0 0
      %331 = vmatpush1.bf16.msra.mxu0 %v300
      %332 = vmatprep.subr.bf16.mxu0 0
      %333 = vmatpush2.bf16.msra.mxu0 0
      %334 = vmatprep.subr.bf16.mxu0 0
      %335 = vmatpush2.bf16.msra.mxu0 0
      %336 = vmatprep.subr.bf16.mxu0 0
      %337 = vmatpush2.bf16.msra.mxu0 0
      %338 = vmatprep.subr.bf16.mxu0 0
      %339 = vmatpush2.bf16.msra.mxu0 0
      %340 = vmatprep.subr.bf16.mxu0 0
      %341 = vmatpush2.bf16.msra.mxu0 0
      %342 = vmatprep.subr.bf16.mxu0 0
      %343 = vmatpush2.bf16.msra.mxu0 0
      %344 = vmatprep.subr.bf16.mxu0 0
      %345 = vmatpush2.bf16.msra.mxu0 0
      %346 = vmatprep.subr.bf16.mxu0 0
      %347 = vmatpush2.bf16.msra.mxu0 0
      %348 = vmatprep.mubr.bf16.mxu0 0
      %349 = vmatmul.mubr.bf16.gmra.mxu0 %v264
      %v350 = vpop.f32.mrf.mxu0
      %v351 = vadd.f32 %v254, %v350
      %v352 = vpop.f32.mrf.mxu0
      %v353 = vpop.f32.mrf.mxu0
      %v354 = vadd.f32 %v254, %v353
      %v355 = vpop.f32.mrf.mxu0
      %356 = vmatprep.mubr.bf16.mxu0 0
      %357 = vmatmul.mubr.bf16.gmra.mxu0 %v265
      %v358 = vpop.f32.mrf.mxu0
      %v359 = vadd.f32 %v254, %v358
      %v360 = vpop.f32.mrf.mxu0
      %v361 = vpop.f32.mrf.mxu0
      %v362 = vadd.f32 %v254, %v361
      %v363 = vpop.f32.mrf.mxu0
      %364 = vdwg.mxu0
      %v365 = vmax.f32 %v351, 0.0
      %v366 = vmax.f32 %v354, 0.0
      %v367 = vmax.f32 %v359, 0.0
      %v368 = vmax.f32 %v362, 0.0
      %v369 = vld [vmem:[%s3] sm:$0x1]
      %v371 = vlaneseq
      %v372 = vshrl.u32 %v371, 7
      %v373 = vsub.s32 0, %v372
      %v374 = vrot.slane %v369, %v373
      %v376 = vmul.f32 %v365, %v374
      %v377 = vmul.f32 %v366, %v374
      %v378 = vmul.f32 %v367, %v374
      %v379 = vmul.f32 %v368, %v374
      %v380 = vld [vmem:[%s4] sm:$0x1]
      %v382 = vlaneseq
      %v383 = vshrl.u32 %v382, 7
      %v384 = vsub.s32 0, %v383
      %v385 = vrot.slane %v380, %v384
      %v387 = vadd.f32 %v376, %v385
      %v388 = vadd.f32 %v377, %v385
      %v389 = vadd.f32 %v378, %v385
      %v390 = vadd.f32 %v379, %v385
      %391 = vst [vmem:[%s226] sm:$0xff] %v387
      %392 = vst [vmem:[%s226 + $0x8] sm:$0xff] %v388
      %393 = vst [vmem:[%s226 + $0x10] sm:$0xff] %v389
      %394 = vst [vmem:[%s226 + $0x18] sm:$0xff] %v390
      %s395 = smul.u32 4, %s16
      %p396 = scmp.lt.s32.totalorder %s395, 15
      %s397 = scalar_select %p396, %s395, 15
      %s398 = smul.addr %s397, 8
      %s399 = scalar_lea.vmem %s5, %s398
      // Predicated region
      $region41: #{downsample_forward.3} parent=39 // pred_check
        %p400 = pneg %p144
      $region42: #{downsample_forward.3} parent=39 // pred_check_branch
        %402 = sbr.rel (%p400) target = $region44
      $region43: #{downsample_forward.3} parent=39 // pred_region
        %s403 = smul.u32 4, %s16
      $region44: #{downsample_forward.3} parent=39 // pred_fallthru
        _
    $region40: #{downsample_forward.3} parent=5 // pred_fallthru
      _
    %p404 = scmp.le.s32.totalorder 2, %s11
    // Predicated region
    $region45: #{downsample_forward.3} parent=5 // pred_check
      %p405 = pneg %p404
    $region46: #{downsample_forward.3} parent=5 // pred_check_branch
      %407 = sbr.rel (%p405) target = $region48
    $region47: #{downsample_forward.3} parent=5 // pred_region
      %s408 = ssub.s32 %s11, 2
      // Predicated region
      $region49: #{downsample_forward.3} parent=47 // pred_check
        %p409 = pneg %p150
      $region50: #{downsample_forward.3} parent=47 // pred_check_branch
        %411 = sbr.rel (%p409) target = $region52
      $region51: #{downsample_forward.3} parent=47 // pred_region
        %s412 = smul.u32 4, %s17
        %p413 = scmp.lt.s32.totalorder %s412, 15
        %s414 = scalar_select %p413, %s412, 15
        %s415 = smul.addr %s414, 8
        %s416 = scalar_lea.vmem %s5, %s415
      $region52: #{downsample_forward.3} parent=47 // pred_fallthru
        _
    $region48: #{downsample_forward.3} parent=5 // pred_fallthru
      _
  $region6: #{downsample_forward.3} parent=0 // loop_footer
    %s15 = sadd.s32 1, %s11
  $region7: #{downsample_forward.3} parent=0 // loop_footer_branch
    %10 = sbr.rel target = $region3
  $region8: #{downsample_forward.3} parent=0 // loop_exit
    _

// kernel: downsample_forward.2
$region0: #{downsample_forward.2}
  #allocation0 [shape = 'u32[]', space=smem, size = 0x4, offset = 0x4, fixed_abs, tag = 'smem constant byte address 0x4 - core index']
  #allocation1 [shape = 'u32[144,128]{1,0:T(1,128)}', space=vmem, size = 0x12000, scoped, tag = 'internal scratch']
  %s0 = inlined_call_operand.vmem [shape: bf16[128,128], index: 0, kind: input, shape index: {}]
  %s1 = inlined_call_operand.vmem [shape: bf16[128,128], index: 1, kind: input, shape index: {}]
  %s2 = inlined_call_operand.vmem [shape: f32[1,128], index: 2, kind: input, shape index: {}]
  %s3 = inlined_call_operand.vmem [shape: f32[4,2,128], index: 3, kind: output, shape index: {}]
  %s4 = sld [smem:[#allocation0]]
  $region45: #{downsample_forward.2} parent=0
    _
  %s6 = ssub.s32 1, %s4
  %s7 = scalar_select 0, %s6, %s4
  loop: start=0, step=1, limit=6
  $region2: #{downsample_forward.2} parent=0 // loop_pre_header
    _
  $region3: #{downsample_forward.2} parent=0 // loop_header
    %s9 = sphi 0, %s13
    %p10 = scmp.ge.s32.totalorder %s9, 6
    %s19 = sphi 0, %s21
    %s22 = sphi 0, %s19
    %s23 = sphi 0, %s22
    %s39 = sphi 0, %s23
    %s43 = sphi 0, %s43
    %s45 = sphi 0, %s43
    %s46 = sphi 0, %s45
    %s60 = sphi 0, %s46
    %s64 = sphi 0, %s64
    %s66 = sphi 0, %s64
    %s67 = sphi 0, %s66
    %s81 = sphi 0, %s67
    %s87 = sphi 0, %s89
    %s90 = sphi 0, %s87
    %s91 = sphi 0, %s90
    %s107 = sphi 0, %s91
  $region4: #{downsample_forward.2} parent=0 // loop_header_branch
    %12 = sbr.rel (%p10) target = $region8
  $region5: #{downsample_forward.2} parent=0 // loop_body
    %s14 = ssub.s32 %s9, 1
    %s15 = ssub.s32 %s9, 2
    %s16 = sadd.s32 %s9, 1
    %s17 = ssub.s32 %s9, %s16
    %p18 = scmp.eq.s32.totalorder %s17, 0
    %s20 = sadd.s32 %s19, 1
    %s21 = scalar_select %p18, %s19, %s20
    %p24 = pneg %p18
    %p25 = scmp.eq.s32.totalorder %s9, 3
    %p26 = por %p24, %p25
    %p27 = scmp.ne.s32.totalorder %s19, %s22
    %p28 = scmp.eq.s32.totalorder %s9, 0
    %p29 = por %p27, %p28
    %p30 = scmp.ne.s32.totalorder %s19, %s22
    %p31 = scmp.eq.s32.totalorder %s14, 3
    %p32 = por %p30, %p31
    %p33 = scmp.ne.s32.totalorder %s22, %s23
    %p34 = scmp.eq.s32.totalorder %s14, 0
    %p35 = por %p33, %p34
    %p36 = scmp.ne.s32.totalorder %s22, %s23
    %p37 = scmp.eq.s32.totalorder %s15, 3
    %p38 = por %p36, %p37
    %p40 = scmp.ne.s32.totalorder %s23, %s39
    %p41 = scmp.eq.s32.totalorder %s15, 0
    %p42 = por %p40, %p41
    %s44 = sadd.s32 %s43, 1
    %p47 = scmp.eq.s32.totalorder %s9, 3
    %p48 = scmp.ne.s32.totalorder %s43, %s45
    %p49 = scmp.eq.s32.totalorder %s9, 0
    %p50 = por %p48, %p49
    %p51 = scmp.ne.s32.totalorder %s43, %s45
    %p52 = scmp.eq.s32.totalorder %s14, 3
    %p53 = por %p51, %p52
    %p54 = scmp.ne.s32.totalorder %s45, %s46
    %p55 = scmp.eq.s32.totalorder %s14, 0
    %p56 = por %p54, %p55
    %p57 = scmp.ne.s32.totalorder %s45, %s46
    %p58 = scmp.eq.s32.totalorder %s15, 3
    %p59 = por %p57, %p58
    %p61 = scmp.ne.s32.totalorder %s46, %s60
    %p62 = scmp.eq.s32.totalorder %s15, 0
    %p63 = por %p61, %p62
    %s65 = sadd.s32 %s64, 1
    %p68 = scmp.eq.s32.totalorder %s9, 3
    %p69 = scmp.ne.s32.totalorder %s64, %s66
    %p70 = scmp.eq.s32.totalorder %s9, 0
    %p71 = por %p69, %p70
    %p72 = scmp.ne.s32.totalorder %s64, %s66
    %p73 = scmp.eq.s32.totalorder %s14, 3
    %p74 = por %p72, %p73
    %p75 = scmp.ne.s32.totalorder %s66, %s67
    %p76 = scmp.eq.s32.totalorder %s14, 0
    %p77 = por %p75, %p76
    %p78 = scmp.ne.s32.totalorder %s66, %s67
    %p79 = scmp.eq.s32.totalorder %s15, 3
    %p80 = por %p78, %p79
    %p82 = scmp.ne.s32.totalorder %s67, %s81
    %p83 = scmp.eq.s32.totalorder %s15, 0
    %p84 = por %p82, %p83
    %s85 = ssub.s32 %s9, %s16
    %p86 = scmp.eq.s32.totalorder %s85, 0
    %s88 = sadd.s32 %s87, 1
    %s89 = scalar_select %p86, %s87, %s88
    %p92 = pneg %p86
    %p93 = scmp.eq.s32.totalorder %s9, 3
    %p94 = por %p92, %p93
    %p95 = scmp.ne.s32.totalorder %s87, %s90
    %p96 = scmp.eq.s32.totalorder %s9, 0
    %p97 = por %p95, %p96
    %p98 = scmp.ne.s32.totalorder %s87, %s90
    %p99 = scmp.eq.s32.totalorder %s14, 3
    %p100 = por %p98, %p99
    %p101 = scmp.ne.s32.totalorder %s90, %s91
    %p102 = scmp.eq.s32.totalorder %s14, 0
    %p103 = por %p101, %p102
    %p104 = scmp.ne.s32.totalorder %s90, %s91
    %p105 = scmp.eq.s32.totalorder %s15, 3
    %p106 = por %p104, %p105
    %p108 = scmp.ne.s32.totalorder %s91, %s107
    %p109 = scmp.eq.s32.totalorder %s15, 0
    %p110 = por %p108, %p109
    %p111 = scmp.le.s32.totalorder 1, %s9
    %p112 = scmp.lt.s32.totalorder %s9, 5
    %p113 = pnand %p111, %p112
    %p114 = pneg %p113
    // Predicated region
    $region9: #{downsample_forward.2} parent=5 // pred_check
      _
    $region10: #{downsample_forward.2} parent=5 // pred_check_branch
      %116 = sbr.rel (%p113) target = $region12
    $region11: #{downsample_forward.2} parent=5 // pred_region
      %s117 = ssub.s32 %s9, 1
      // Predicated region
      $region13: #{downsample_forward.2} parent=11 // pred_check
        %p118 = pneg %p56
      $region14: #{downsample_forward.2} parent=11 // pred_check_branch
        %120 = sbr.rel (%p118) target = $region16
      $region15: #{downsample_forward.2} parent=11 // pred_region
        _
      $region16: #{downsample_forward.2} parent=11 // pred_fallthru
        _
      // Predicated region
      $region17: #{downsample_forward.2} parent=11 // pred_check
        %p121 = pneg %p77
      $region18: #{downsample_forward.2} parent=11 // pred_check_branch
        %123 = sbr.rel (%p121) target = $region20
      $region19: #{downsample_forward.2} parent=11 // pred_region
        _
      $region20: #{downsample_forward.2} parent=11 // pred_fallthru
        _
    $region12: #{downsample_forward.2} parent=5 // pred_fallthru
      _
    %p124 = scmp.lt.s32.totalorder %s9, 4
    // Predicated region
    $region21: #{downsample_forward.2} parent=5 // pred_check
      %p125 = pneg %p124
    $region22: #{downsample_forward.2} parent=5 // pred_check_branch
      %127 = sbr.rel (%p125) target = $region24
    $region23: #{downsample_forward.2} parent=5 // pred_region
      // Predicated region
      $region25: #{downsample_forward.2} parent=23 // pred_check
        %p128 = pneg %p29
      $region26: #{downsample_forward.2} parent=23 // pred_check_branch
        %130 = sbr.rel (%p128) target = $region28
      $region27: #{downsample_forward.2} parent=23 // pred_region
        %s131 = smul.u32 4, %s9
        %p132 = scmp.lt.s32.totalorder %s131, 15
        %s133 = scalar_select %p132, %s131, 15
        %s134 = smul.addr %s133, 4
        %s135 = scalar_lea.vmem %s0, %s134
        %s136 = smul.u32 4, %s9
      $region28: #{downsample_forward.2} parent=23 // pred_fallthru
        _
    $region24: #{downsample_forward.2} parent=5 // pred_fallthru
      _
    %p137 = scmp.le.s32.totalorder 1, %s9
    %p138 = scmp.lt.s32.totalorder %s9, 5
    %p139 = pnand %p137, %p138
    %p140 = pneg %p139
    // Predicated region
    $region29: #{downsample_forward.2} parent=5 // pred_check
      _
    $region30: #{downsample_forward.2} parent=5 // pred_check_branch
      %142 = sbr.rel (%p139) target = $region32
    $region31: #{downsample_forward.2} parent=5 // pred_region
      %s143 = ssub.s32 %s9, 1
      %s144 = smul.u32 4, %s14
      %p145 = scmp.lt.s32.totalorder %s144, 15
      %s146 = scalar_select %p145, %s144, 15
      %s147 = smul.addr %s146, 4
      %s148 = scalar_lea.vmem %s0, %s147
      %p149 = pneg %p35
      %p150 = pneg %p32
      %p151 = pneg %p56
      %p152 = pneg %p53
      %p153 = pneg %p77
      %p154 = pneg %p74
      %p155 = pneg %p103
      %p156 = pneg %p100
      %p157 = scmp.lt.s32.totalorder %s14, 3
      %s158 = scalar_select %p157, %s14, 3
      %s159 = smul.addr %s158, 2
      %s160 = scalar_lea.vmem %s3, %s159
      %s161 = smul.u32 4, %s14
      %p162 = scmp.lt.s32.totalorder %s161, 15
      %s163 = scalar_select %p162, %s161, 15
      %s164 = smul.addr %s163, 4
      %s165 = scalar_lea.vmem %s0, %s164
      %s166 = smul.u32 4, %s14
      %p167 = scmp.lt.s32.totalorder %s14, 3
      %s168 = scalar_select %p167, %s14, 3
      %s169 = smul.addr %s168, 2
      %s170 = scalar_lea.vmem %s3, %s169
      %v172 = vld [vmem:[%s165] sm:$0xf]
      %v173 = vld [vmem:[%s165 + $0x4] sm:$0xf]
      %v174 = vld [vmem:[%s165 + $0x8] sm:$0xf]
      %v175 = vld [vmem:[%s165 + $0xc] sm:$0xf]
      %v176 = vld [vmem:[%s1] sm:$0xf]
      %v177 = vld [vmem:[%s1 + $0x4] sm:$0xf]
      %v178 = vld [vmem:[%s1 + $0x8] sm:$0xf]
      %v179 = vld [vmem:[%s1 + $0xc] sm:$0xf]
      %v180 = vld [vmem:[%s1 + $0x10] sm:$0xf]
      %v181 = vld [vmem:[%s1 + $0x14] sm:$0xf]
      %v182 = vld [vmem:[%s1 + $0x18] sm:$0xf]
      %v183 = vld [vmem:[%s1 + $0x1c] sm:$0xf]
      %v184 = vld [vmem:[%s1 + $0x20] sm:$0xf]
      %v185 = vld [vmem:[%s1 + $0x24] sm:$0xf]
      %v186 = vld [vmem:[%s1 + $0x28] sm:$0xf]
      %v187 = vld [vmem:[%s1 + $0x2c] sm:$0xf]
      %v188 = vld [vmem:[%s1 + $0x30] sm:$0xf]
      %v189 = vld [vmem:[%s1 + $0x34] sm:$0xf]
      %v190 = vld [vmem:[%s1 + $0x38] sm:$0xf]
      %v191 = vld [vmem:[%s1 + $0x3c] sm:$0xf]
      %v192 = vld [vmem:[%s2] sm:$0x1]
      %v194 = vlaneseq
      %v195 = vshrl.u32 %v194, 7
      %v196 = vsub.s32 0, %v195
      %v197 = vrot.slane %v192, %v196
      %v203 = vunpack.c.l.b16 %v172
      %v204 = vunpack.c.l.b16 %v173
      %v205 = vunpack.c.l.b16 %v174
      %v206 = vunpack.c.l.b16 %v175
      %v207 = vpack.c.b16 %v204, %v203
      %v208 = vpack.c.b16 %v206, %v205
      %v227 = vunpack.c.l.b16 %v176
      %v228 = vunpack.c.l.b16 %v177
      %v229 = vunpack.c.l.b16 %v178
      %v230 = vunpack.c.l.b16 %v179
      %v231 = vunpack.c.l.b16 %v180
      %v232 = vunpack.c.l.b16 %v181
      %v233 = vunpack.c.l.b16 %v182
      %v234 = vunpack.c.l.b16 %v183
      %v235 = vunpack.c.l.b16 %v184
      %v236 = vunpack.c.l.b16 %v185
      %v237 = vunpack.c.l.b16 %v186
      %v238 = vunpack.c.l.b16 %v187
      %v239 = vunpack.c.l.b16 %v188
      %v240 = vunpack.c.l.b16 %v189
      %v241 = vunpack.c.l.b16 %v190
      %v242 = vunpack.c.l.b16 %v191
      %v243 = vpack.c.b16 %v228, %v227
      %v244 = vpack.c.b16 %v230, %v229
      %v245 = vpack.c.b16 %v232, %v231
      %v246 = vpack.c.b16 %v234, %v233
      %v247 = vpack.c.b16 %v236, %v235
      %v248 = vpack.c.b16 %v238, %v237
      %v249 = vpack.c.b16 %v240, %v239
      %v250 = vpack.c.b16 %v242, %v241
      %259 = vmatprep.subr.bf16.mxu0 0
      %260 = vmatpush1.bf16.msra.mxu0 %v250
      %261 = vmatprep.subr.bf16.mxu0 0
      %262 = vmatpush1.bf16.msra.mxu0 %v249
      %263 = vmatprep.subr.bf16.mxu0 0
      %264 = vmatpush1.bf16.msra.mxu0 %v248
      %265 = vmatprep.subr.bf16.mxu0 0
      %266 = vmatpush1.bf16.msra.mxu0 %v247
      %267 = vmatprep.subr.bf16.mxu0 0
      %268 = vmatpush1.bf16.msra.mxu0 %v246
      %269 = vmatprep.subr.bf16.mxu0 0
      %270 = vmatpush1.bf16.msra.mxu0 %v245
      %271 = vmatprep.subr.bf16.mxu0 0
      %272 = vmatpush1.bf16.msra.mxu0 %v244
      %273 = vmatprep.subr.bf16.mxu0 0
      %274 = vmatpush1.bf16.msra.mxu0 %v243
      %275 = vmatprep.subr.bf16.mxu0 0
      %276 = vmatpush2.bf16.msra.mxu0 0
      %277 = vmatprep.subr.bf16.mxu0 0
      %278 = vmatpush2.bf16.msra.mxu0 0
      %279 = vmatprep.subr.bf16.mxu0 0
      %280 = vmatpush2.bf16.msra.mxu0 0
      %281 = vmatprep.subr.bf16.mxu0 0
      %282 = vmatpush2.bf16.msra.mxu0 0
      %283 = vmatprep.subr.bf16.mxu0 0
      %284 = vmatpush2.bf16.msra.mxu0 0
      %285 = vmatprep.subr.bf16.mxu0 0
      %286 = vmatpush2.bf16.msra.mxu0 0
      %287 = vmatprep.subr.bf16.mxu0 0
      %288 = vmatpush2.bf16.msra.mxu0 0
      %289 = vmatprep.subr.bf16.mxu0 0
      %290 = vmatpush2.bf16.msra.mxu0 0
      %291 = vmatprep.mubr.bf16.mxu0 0
      %292 = vmatmul.mubr.bf16.gmra.mxu0 %v207
      %v293 = vpop.f32.mrf.mxu0
      %v294 = vadd.f32 %v197, %v293
      %v295 = vpop.f32.mrf.mxu0
      %v296 = vpop.f32.mrf.mxu0
      %v297 = vadd.f32 %v197, %v296
      %v298 = vpop.f32.mrf.mxu0
      %299 = vmatprep.mubr.bf16.mxu0 0
      %300 = vmatmul.mubr.bf16.gmra.mxu0 %v208
      %v301 = vpop.f32.mrf.mxu0
      %v302 = vadd.f32 %v197, %v301
      %v303 = vpop.f32.mrf.mxu0
      %v304 = vpop.f32.mrf.mxu0
      %v305 = vadd.f32 %v197, %v304
      %v306 = vpop.f32.mrf.mxu0
      %307 = vdwg.mxu0
      %v308 = vmax.f32 %v294, 0.0
      %v309 = vmax.f32 %v297, 0.0
      %v310 = vmax.f32 %v302, 0.0
      %v311 = vmax.f32 %v305, 0.0
      %v312 = vadd.f32 %v308, %v309
      %v313 = vadd.f32 %v312, %v310
      %v314 = vadd.f32 %v313, %v311
      %v315 = vrot.slane %v314, 4
      %v316 = vadd.f32 %v314, %v315
      %v317 = vrot.slane %v316, 2
      %v318 = vadd.f32 %v316, %v317
      %v319 = vrot.slane %v318, 1
      %v320 = vadd.f32 %v318, %v319
      %v321 = vmul.f32 %v308, %v308
      %v322 = vmul.f32 %v309, %v309
      %v323 = vmul.f32 %v310, %v310
      %v324 = vmul.f32 %v311, %v311
      %v325 = vadd.f32 %v321, %v322
      %v326 = vadd.f32 %v325, %v323
      %v327 = vadd.f32 %v326, %v324
      %v328 = vrot.slane %v327, 4
      %v329 = vadd.f32 %v327, %v328
      %v330 = vrot.slane %v329, 2
      %v331 = vadd.f32 %v329, %v330
      %v332 = vrot.slane %v331, 1
      %v333 = vadd.f32 %v331, %v332
      %vm334 = vcmask 1040384
      %v335 = vsel %vm334, %v320, %v333
      %336 = vst [vmem:[%s170] sm:$0x3] %v335
      %p337 = scmp.lt.s32.totalorder %s14, 3
      %s338 = scalar_select %p337, %s14, 3
      %s339 = smul.addr %s338, 2
      %s340 = scalar_lea.vmem %s3, %s339
      // Predicated region
      $region33: #{downsample_forward.2} parent=31 // pred_check
        %p341 = pneg %p100
      $region34: #{downsample_forward.2} parent=31 // pred_check_branch
        %343 = sbr.rel (%p341) target = $region36
      $region35: #{downsample_forward.2} parent=31 // pred_region
        _
      $region36: #{downsample_forward.2} parent=31 // pred_fallthru
        _
    $region32: #{downsample_forward.2} parent=5 // pred_fallthru
      _
    %p344 = scmp.le.s32.totalorder 2, %s9
    // Predicated region
    $region37: #{downsample_forward.2} parent=5 // pred_check
      %p345 = pneg %p344
    $region38: #{downsample_forward.2} parent=5 // pred_check_branch
      %347 = sbr.rel (%p345) target = $region40
    $region39: #{downsample_forward.2} parent=5 // pred_region
      %s348 = ssub.s32 %s9, 2
      // Predicated region
      $region41: #{downsample_forward.2} parent=39 // pred_check
        %p349 = pneg %p106
      $region42: #{downsample_forward.2} parent=39 // pred_check_branch
        %351 = sbr.rel (%p349) target = $region44
      $region43: #{downsample_forward.2} parent=39 // pred_region
        %p352 = scmp.lt.s32.totalorder %s15, 3
        %s353 = scalar_select %p352, %s15, 3
        %s354 = smul.addr %s353, 2
        %s355 = scalar_lea.vmem %s3, %s354
      $region44: #{downsample_forward.2} parent=39 // pred_fallthru
        _
    $region40: #{downsample_forward.2} parent=5 // pred_fallthru
      _
  $region6: #{downsample_forward.2} parent=0 // loop_footer
    %s13 = sadd.s32 1, %s9
  $region7: #{downsample_forward.2} parent=0 // loop_footer_branch
    %8 = sbr.rel target = $region3
  $region8: #{downsample_forward.2} parent=0 // loop_exit
    _

</llo_original>
